<compile_context>
chip_gen: v7x
topology: tpu7x:2x2x1
jax: 0.10.0
libtpu: 0.0.40
codegen_flags: <defaults>
</compile_context>

<pallas_src>
import math

import jax
import jax.numpy as jnp
from jax import lax
from jax.experimental import pallas as pl
from jax.experimental.pallas import tpu as pltpu

SQRT2 = math.sqrt(2.0)


# ----------------------------- wrapper precompute -----------------------------

def _bilinear_matrix(n):
    """(2n, n) matrix for torch bilinear x2 upsample (align_corners=False)."""
    o = jnp.arange(2 * n, dtype=jnp.float32)
    src = jnp.maximum((o + 0.5) * 0.5 - 0.5, 0.0)
    i0 = jnp.floor(src).astype(jnp.int32)
    i1 = jnp.minimum(i0 + 1, n - 1)
    lam = src - i0.astype(jnp.float32)
    eye = jnp.eye(n, dtype=jnp.float32)
    return (1.0 - lam)[:, None] * eye[i0] + lam[:, None] * eye[i1]


def _shift_stack(mat):
    """(3, rows, cols) with result[k][a] = mat[a + k - 1] (zero rows outside).

    Encodes the conv's zero padding along that axis exactly."""
    rows, cols = mat.shape
    z = jnp.zeros((1, cols), mat.dtype)
    padded = jnp.concatenate([z, mat, z], axis=0)          # (rows + 2, cols)
    return jnp.stack([padded[k:k + rows] for k in range(3)], axis=0)


# --------------------------------- kernel ------------------------------------

def _make_kernel(wc, wo, mm_dtype):
    """wc = W*Cin (conv lane width), wo = 2*W*Cout (output lane width)."""

    def _cast(v):
        return v if mm_dtype is None else v.astype(mm_dtype)

    def _leaky(v):
        return jnp.where(v >= 0.0, v, 0.2 * v)

    def _tap_cat(a):
        # Lane-concat [shift_down(a) | a | shift_up(a)]: block k holds
        # a[r + k - 1] on row r with zero rows at the H boundary — exactly the
        # conv's zero padding along H.  Shifts are sublane slices (XLU/load
        # slots), not matmuls; the lane concat is at 128-lane multiples.
        z = jnp.zeros_like(a[:1])
        return jnp.concatenate(
            [jnp.concatenate([z, a[:-1]], axis=0),
             a,
             jnp.concatenate([a[1:], z], axis=0)],
            axis=1)

    def kernel(x_ref, q_ref, uh_ref, r_ref, m3_ref, b1_ref, b2_ref, o_ref):
        x = _cast(x_ref[0])                                     # (H, wc)

        # ---- conv1 (3x3, Cin->Cin, pad 1): one K = 3*wc matmul --------------
        acc1 = jnp.dot(_tap_cat(x), q_ref[...],
                       preferred_element_type=jnp.float32)      # (H, wc)
        y1 = _leaky(acc1 + b1_ref[...])                         # x*sqrt2 folded into R

        # ---- skip pre-mix: 1x1 conv + W-upsample (1/sqrt2 folded into M3) ---
        s_pre = jnp.dot(x, m3_ref[...],
                        preferred_element_type=jnp.float32)     # (H, wo)

        # ---- one H-upsample matmul feeds BOTH the conv2 input and the skip --
        left = jnp.concatenate([_cast(y1), _cast(s_pre)], axis=1)   # (H, wc+wo)
        up = jnp.dot(uh_ref[...], left,
                     preferred_element_type=jnp.float32)        # (2H, wc+wo)
        z = _cast(up[:, :wc])                                   # (2H, wc)
        skip = up[:, wc:]                                       # (2H, wo) f32

        # ---- conv2 (up2 + 3x3, Cin->Cout, pad 1): one K = 3*wc matmul -------
        acc2 = jnp.dot(_tap_cat(z), r_ref[...],
                       preferred_element_type=jnp.float32)      # (2H, wo)
        y2 = _leaky(acc2 + b2_ref[...])                         # x*sqrt2 cancels /sqrt2

        o_ref[0] = (y2 + skip).astype(o_ref.dtype)

    return kernel


# -------------------------------- wrappers ------------------------------------

def res_up_block_folded(x_fold, params, *, matmul_dtype=None):
    """Lane-folded forward: (B, H, W*Cin) -> (B, 2H, 2W*Cout) float32.

    Production callers that keep activations lane-folded should call this
    directly and skip the NCHW transposes in `res_up_block`."""
    w1, b1, w2, b2, w3 = (params["w1"], params["b1"], params["w2"],
                          params["b2"], params["w3"])
    Cin = w1.shape[2]
    Cout = w2.shape[3]
    B, H, WC = x_fold.shape
    W = WC // Cin
    f32 = jnp.float32

    # Fold equalized-lr scales into the weights once (wrapper-side).
    w1s = w1.astype(f32) * (1.0 / math.sqrt(Cin * 9))        # (3,3,Cin,Cin)
    w2s = w2.astype(f32) * (1.0 / math.sqrt(Cin * 9))        # (3,3,Cin,Cout)
    w3s = w3.astype(f32) * (1.0 / math.sqrt(Cin))            # (Cin,Cout)

    U_H = _bilinear_matrix(H)                                # (2H, H)
    U_W = _bilinear_matrix(W)                                # (2W, W)
    Dw = _shift_stack(jnp.eye(W, dtype=f32))                 # (3, W, W)  W-tap shifts
    V = _shift_stack(U_W)                                    # (3, 2W, W)

    # Stacked banded right-hand matrices on the folded (W, C) lane axis.
    #   Q[(ky,w',ci),(w,co)] = w1s[ky, w'-w+1, ci, co]                (conv1 W taps)
    #   R[(ky,j, ci),(b,co)] = sqrt2 * sum_kx U_W[b+kx-1, j] w2s[ky,kx,ci,co]
    #   M3[(w',ci),(b,co)]   = U_W[b, w'] * w3s[ci, co] / sqrt2       (skip 1x1 + up-W)
    # sqrt2 folds: flrelu1's x*sqrt2 -> R; flrelu2's x*sqrt2 cancels the final
    # /sqrt2; the skip's /sqrt2 -> M3.  Biases untouched.
    Q = jnp.einsum('xwv,yxio->yviwo', Dw, w1s).reshape(3 * W * Cin, W * Cin)
    R = SQRT2 * jnp.einsum('xbj,yxio->yjibo', V, w2s).reshape(
        3 * W * Cin, 2 * W * Cout)
    M3 = (1.0 / SQRT2) * jnp.einsum('bw,io->wibo', U_W, w3s).reshape(
        W * Cin, 2 * W * Cout)

    # FusedLeakyReLU biases folded onto the (W, C) lane axis.
    b1f = jnp.tile(b1.astype(f32), W).reshape(1, W * Cin)
    b2f = jnp.tile(b2.astype(f32), 2 * W).reshape(1, 2 * W * Cout)

    # Optional bf16 operands (v6e/v7x): pre-cast the constant matrices once in
    # the wrapper; activations are cast exactly once inside the kernel.
    if matmul_dtype is not None:
        Q = Q.astype(matmul_dtype)
        R = R.astype(matmul_dtype)
        M3 = M3.astype(matmul_dtype)
        U_Hm = U_H.astype(matmul_dtype)
    else:
        U_Hm = U_H

    wc, wo = W * Cin, 2 * W * Cout
    return pl.pallas_call(
        _make_kernel(wc, wo, matmul_dtype),
        out_shape=jax.ShapeDtypeStruct((B, 2 * H, wo), f32),
        grid_spec=pltpu.PrefetchScalarGridSpec(
            num_scalar_prefetch=0,
            grid=(B,),
            in_specs=[
                pl.BlockSpec((1, H, wc), lambda b: (b, 0, 0)),      # x (folded)
                pl.BlockSpec((3 * wc, wc), lambda b: (0, 0)),       # Q (stacked)
                pl.BlockSpec((2 * H, H), lambda b: (0, 0)),         # U_H
                pl.BlockSpec((3 * wc, wo), lambda b: (0, 0)),       # R (stacked, *sqrt2)
                pl.BlockSpec((wc, wo), lambda b: (0, 0)),           # M3 (/sqrt2)
                pl.BlockSpec((1, wc), lambda b: (0, 0)),            # b1 lanes
                pl.BlockSpec((1, wo), lambda b: (0, 0)),            # b2 lanes
            ],
            out_specs=pl.BlockSpec((1, 2 * H, wo), lambda b: (b, 0, 0)),
        ),
        compiler_params=pltpu.CompilerParams(
            dimension_semantics=("parallel",)),
    )(x_fold.astype(f32), Q, U_Hm, R, M3, b1f, b2f)


def res_up_block(x_nchw, params, *, matmul_dtype=None):
    """NCHW convenience wrapper: (B, Cin, H, W) float32 -> (B, Cout, 2H, 2W)."""
    B, Cin, H, W = x_nchw.shape
    Cout = params["w2"].shape[-1]
    # NCHW -> lane-folded NHWC rows (B, H, W*Cin).
    x_fold = jnp.transpose(x_nchw, (0, 2, 3, 1)).reshape(B, H, W * Cin)
    out = res_up_block_folded(x_fold, params, matmul_dtype=matmul_dtype)
    # (B, 2H, 2W*Cout) -> (B, Cout, 2H, 2W)
    return jnp.transpose(out.reshape(B, 2 * H, 2 * W, Cout), (0, 3, 1, 2))


# ------------------------ pure-JAX reference (check) --------------------------

def _ref_up2(x):
    """Bilinear x2 on NCHW, directly implementing torch's half-pixel formula."""
    B, C, H, W = x.shape

    def src_idx(n):
        o = jnp.arange(2 * n, dtype=jnp.float32)
        src = jnp.maximum((o + 0.5) * 0.5 - 0.5, 0.0)
        i0 = jnp.floor(src).astype(jnp.int32)
        i1 = jnp.minimum(i0 + 1, n - 1)
        lam = src - i0.astype(jnp.float32)
        return i0, i1, lam

    i0, i1, lh = src_idx(H)
    j0, j1, lw = src_idx(W)
    xh = (x[:, :, i0, :] * (1.0 - lh)[None, None, :, None]
          + x[:, :, i1, :] * lh[None, None, :, None])
    return xh[:, :, :, j0] * (1.0 - lw) + xh[:, :, :, j1] * lw


def _ref_forward(x, params):
    w1, b1, w2, b2, w3 = (params["w1"], params["b1"], params["w2"],
                          params["b2"], params["w3"])
    Cin = x.shape[1]

    def conv(inp, w, pad):
        return lax.conv_general_dilated(
            inp, w, window_strides=(1, 1), padding=[(pad, pad), (pad, pad)],
            dimension_numbers=("NCHW", "HWIO", "NCHW"),
            precision=lax.Precision.HIGHEST)

    def flrelu(y, b):
        y = y + b[None, :, None, None]
        return jnp.where(y >= 0.0, y, 0.2 * y) * SQRT2

    s1 = 1.0 / math.sqrt(Cin * 9)
    s3 = 1.0 / math.sqrt(Cin)

    y = flrelu(conv(x, w1 * s1, 1), b1)
    y = flrelu(conv(_ref_up2(y), w2 * s1, 1), b2)
    skip = conv(_ref_up2(x), w3.reshape(1, 1, Cin, -1) * s3, 0)
    return (y + skip) / SQRT2


# ---------------------------------- main --------------------------------------

if __name__ == "__main__":
    B, Cin, Cout, H, W = 2, 8, 4, 16, 16

    key = jax.random.PRNGKey(0)
    kx, k1, kb1, k2, kb2, k3 = jax.random.split(key, 6)

    x = jax.random.normal(kx, (B, Cin, H, W), jnp.float32)
    params = {
        # weights stored as HWIO (== torch (Co,Ci,kh,kw) transposed), randn init
        "w1": jax.random.normal(k1, (3, 3, Cin, Cin), jnp.float32),
        "b1": 0.1 * jax.random.normal(kb1, (Cin,), jnp.float32),
        "w2": jax.random.normal(k2, (3, 3, Cin, Cout), jnp.float32),
        "b2": 0.1 * jax.random.normal(kb2, (Cout,), jnp.float32),
        "w3": jax.random.normal(k3, (Cin, Cout), jnp.float32),
    }

    # f32 matmuls by default (exact vs reference; safe on v5e).
    # On v6e/v7x, pass matmul_dtype=jnp.bfloat16 for bf16 MXU operands
    # (weights pre-cast wrapper-side; validate tolerance before enabling).
    out = jax.block_until_ready(res_up_block(x, params))
    ref = jax.block_until_ready(_ref_forward(x, params))

    assert out.shape == (B, Cout, 2 * H, 2 * W), out.shape
    if not jnp.allclose(out, ref, atol=2e-3, rtol=2e-3):
        max_err = float(jnp.max(jnp.abs(out - ref)))
        raise AssertionError(f"Pallas kernel mismatch vs reference, max_err={max_err}")

    print("KERNEL_OK")
</pallas_src>

<mosaic_0001>
module attributes {stable_mosaic.version = 11 : i64} {
  func.func @kernel(%arg0: i32, %arg1: memref<1x16x128xf32, #tpu.memory_space<vmem>>, %arg2: memref<384x128xf32, #tpu.memory_space<vmem>>, %arg3: memref<32x16xf32, #tpu.memory_space<vmem>>, %arg4: memref<384x128xf32, #tpu.memory_space<vmem>>, %arg5: memref<128x128xf32, #tpu.memory_space<vmem>>, %arg6: memref<1x128xf32, #tpu.memory_space<vmem>>, %arg7: memref<1x128xf32, #tpu.memory_space<vmem>>, %arg8: memref<1x32x128xf32, #tpu.memory_space<vmem>>) attributes {dimension_semantics = [#tpu.dimension_semantics<parallel>], iteration_bounds = array<i64: 2>, scalar_prefetch = 0 : i64, scratch_operands = 0 : i64, tpu.core_type = #tpu.core_type<tc>, window_params = [{transform_indices = @transform_0, window_bounds = array<i64: 1, 16, 128>}, {pipeline_mode = #tpu.pipeline_mode<synchronous>, transform_indices = @transform_1, window_bounds = array<i64: 384, 128>}, {pipeline_mode = #tpu.pipeline_mode<synchronous>, transform_indices = @transform_2, window_bounds = array<i64: 32, 16>}, {pipeline_mode = #tpu.pipeline_mode<synchronous>, transform_indices = @transform_3, window_bounds = array<i64: 384, 128>}, {pipeline_mode = #tpu.pipeline_mode<synchronous>, transform_indices = @transform_4, window_bounds = array<i64: 128, 128>}, {pipeline_mode = #tpu.pipeline_mode<synchronous>, transform_indices = @transform_5, window_bounds = array<i64: 1, 128>}, {pipeline_mode = #tpu.pipeline_mode<synchronous>, transform_indices = @transform_6, window_bounds = array<i64: 1, 128>}, {transform_indices = @transform_7, window_bounds = array<i64: 1, 32, 128>}]} {
    %c0 = arith.constant 0 : index
    %c0_0 = arith.constant 0 : index
    %c0_1 = arith.constant 0 : index
    %0 = vector.load %arg1[%c0, %c0_0, %c0_1] : memref<1x16x128xf32, #tpu.memory_space<vmem>>, vector<1x16x128xf32>
    %1 = vector.shape_cast %0 : vector<1x16x128xf32> to vector<16x128xf32>
    %cst = arith.constant 0.000000e+00 : f32
    %2 = vector.broadcast %cst : f32 to vector<1x128xf32>
    %3 = vector.extract_strided_slice %1 {offsets = [0, 0], sizes = [15, 128], strides = [1, 1]} : vector<16x128xf32> to vector<15x128xf32>
    %4 = tpu.concatenate %2, %3 in 0 : vector<1x128xf32>, vector<15x128xf32> -> vector<16x128xf32>
    %5 = vector.extract_strided_slice %1 {offsets = [1, 0], sizes = [15, 128], strides = [1, 1]} : vector<16x128xf32> to vector<15x128xf32>
    %6 = tpu.concatenate %5, %2 in 0 : vector<15x128xf32>, vector<1x128xf32> -> vector<16x128xf32>
    %7 = tpu.concatenate %4, %1, %6 in 1 : vector<16x128xf32>, vector<16x128xf32>, vector<16x128xf32> -> vector<16x384xf32>
    %c0_2 = arith.constant 0 : index
    %c0_3 = arith.constant 0 : index
    %8 = vector.load %arg2[%c0_2, %c0_3] : memref<384x128xf32, #tpu.memory_space<vmem>>, vector<384x128xf32>
    %cst_4 = arith.constant dense<0.000000e+00> : vector<16x128xf32>
    %9 = tpu.matmul %7, %8, %cst_4 {dimension_numbers = #tpu.dot_dimension_numbers<[1], [0], [0], [1], [0, 0, 1, 1], [], []>} : vector<16x384xf32>, vector<384x128xf32>, vector<16x128xf32> -> vector<16x128xf32>
    %c0_5 = arith.constant 0 : index
    %c0_6 = arith.constant 0 : index
    %10 = vector.load %arg6[%c0_5, %c0_6] : memref<1x128xf32, #tpu.memory_space<vmem>>, vector<1x128xf32>
    %11 = vector.broadcast %10 : vector<1x128xf32> to vector<16x128xf32>
    %12 = arith.addf %9, %11 : vector<16x128xf32>
    %cst_7 = arith.constant 0.000000e+00 : f32
    %13 = vector.broadcast %cst_7 : f32 to vector<16x128xf32>
    %14 = arith.cmpf oge, %12, %13 : vector<16x128xf32>
    %cst_8 = arith.constant 2.000000e-01 : f32
    %15 = vector.broadcast %cst_8 : f32 to vector<16x128xf32>
    %16 = arith.mulf %15, %12 : vector<16x128xf32>
    %17 = arith.select %14, %12, %16 : vector<16x128xi1>, vector<16x128xf32>
    %c0_9 = arith.constant 0 : index
    %c0_10 = arith.constant 0 : index
    %18 = vector.load %arg5[%c0_9, %c0_10] : memref<128x128xf32, #tpu.memory_space<vmem>>, vector<128x128xf32>
    %cst_11 = arith.constant dense<0.000000e+00> : vector<16x128xf32>
    %19 = tpu.matmul %1, %18, %cst_11 {dimension_numbers = #tpu.dot_dimension_numbers<[1], [0], [0], [1], [0, 0, 1, 1], [], []>} : vector<16x128xf32>, vector<128x128xf32>, vector<16x128xf32> -> vector<16x128xf32>
    %20 = tpu.concatenate %17, %19 in 1 : vector<16x128xf32>, vector<16x128xf32> -> vector<16x256xf32>
    %c0_12 = arith.constant 0 : index
    %c0_13 = arith.constant 0 : index
    %21 = vector.load %arg3[%c0_12, %c0_13] : memref<32x16xf32, #tpu.memory_space<vmem>>, vector<32x16xf32>
    %cst_14 = arith.constant dense<0.000000e+00> : vector<32x256xf32>
    %22 = tpu.matmul %21, %20, %cst_14 {dimension_numbers = #tpu.dot_dimension_numbers<[1], [0], [0], [1], [0, 0, 1, 1], [], []>} : vector<32x16xf32>, vector<16x256xf32>, vector<32x256xf32> -> vector<32x256xf32>
    %23 = vector.extract_strided_slice %22 {offsets = [0, 0], sizes = [32, 128], strides = [1, 1]} : vector<32x256xf32> to vector<32x128xf32>
    %24 = vector.extract_strided_slice %22 {offsets = [0, 128], sizes = [32, 128], strides = [1, 1]} : vector<32x256xf32> to vector<32x128xf32>
    %cst_15 = arith.constant 0.000000e+00 : f32
    %25 = vector.broadcast %cst_15 : f32 to vector<1x128xf32>
    %26 = vector.extract_strided_slice %23 {offsets = [0, 0], sizes = [31, 128], strides = [1, 1]} : vector<32x128xf32> to vector<31x128xf32>
    %27 = tpu.concatenate %25, %26 in 0 : vector<1x128xf32>, vector<31x128xf32> -> vector<32x128xf32>
    %28 = vector.extract_strided_slice %23 {offsets = [1, 0], sizes = [31, 128], strides = [1, 1]} : vector<32x128xf32> to vector<31x128xf32>
    %29 = tpu.concatenate %28, %25 in 0 : vector<31x128xf32>, vector<1x128xf32> -> vector<32x128xf32>
    %30 = tpu.concatenate %27, %23, %29 in 1 : vector<32x128xf32>, vector<32x128xf32>, vector<32x128xf32> -> vector<32x384xf32>
    %c0_16 = arith.constant 0 : index
    %c0_17 = arith.constant 0 : index
    %31 = vector.load %arg4[%c0_16, %c0_17] : memref<384x128xf32, #tpu.memory_space<vmem>>, vector<384x128xf32>
    %cst_18 = arith.constant dense<0.000000e+00> : vector<32x128xf32>
    %32 = tpu.matmul %30, %31, %cst_18 {dimension_numbers = #tpu.dot_dimension_numbers<[1], [0], [0], [1], [0, 0, 1, 1], [], []>} : vector<32x384xf32>, vector<384x128xf32>, vector<32x128xf32> -> vector<32x128xf32>
    %c0_19 = arith.constant 0 : index
    %c0_20 = arith.constant 0 : index
    %33 = vector.load %arg7[%c0_19, %c0_20] : memref<1x128xf32, #tpu.memory_space<vmem>>, vector<1x128xf32>
    %34 = vector.broadcast %33 : vector<1x128xf32> to vector<32x128xf32>
    %35 = arith.addf %32, %34 : vector<32x128xf32>
    %cst_21 = arith.constant 0.000000e+00 : f32
    %36 = vector.broadcast %cst_21 : f32 to vector<32x128xf32>
    %37 = arith.cmpf oge, %35, %36 : vector<32x128xf32>
    %cst_22 = arith.constant 2.000000e-01 : f32
    %38 = vector.broadcast %cst_22 : f32 to vector<32x128xf32>
    %39 = arith.mulf %38, %35 : vector<32x128xf32>
    %40 = arith.select %37, %35, %39 : vector<32x128xi1>, vector<32x128xf32>
    %41 = arith.addf %40, %24 : vector<32x128xf32>
    %c0_23 = arith.constant 0 : index
    %c0_24 = arith.constant 0 : index
    %c0_25 = arith.constant 0 : index
    %42 = vector.load %arg8[%c0_23, %c0_24, %c0_25] : memref<1x32x128xf32, #tpu.memory_space<vmem>>, vector<1x32x128xf32>
    %43 = vector.shape_cast %42 : vector<1x32x128xf32> to vector<32x128xf32>
    %44 = vector.shape_cast %41 : vector<32x128xf32> to vector<1x32x128xf32>
    tpu.vector_store %arg8[%c0_23, %c0_24, %c0_25], %44 {strides = array<i32>} : memref<1x32x128xf32, #tpu.memory_space<vmem>>, vector<1x32x128xf32>,
    return
  }
  func.func @transform_0(%arg0: i32) -> (i32, i32, i32) {
    %c0_i32 = arith.constant 0 : i32
    %c0_i32_0 = arith.constant 0 : i32
    %c0_i32_1 = arith.constant 0 : i32
    return %arg0, %c0_i32, %c0_i32_0 : i32, i32, i32
  }
  func.func @transform_1(%arg0: i32) -> (i32, i32) {
    %c0_i32 = arith.constant 0 : i32
    %c0_i32_0 = arith.constant 0 : i32
    %c0_i32_1 = arith.constant 0 : i32
    return %c0_i32, %c0_i32_0 : i32, i32
  }
  func.func @transform_2(%arg0: i32) -> (i32, i32) {
    %c0_i32 = arith.constant 0 : i32
    %c0_i32_0 = arith.constant 0 : i32
    %c0_i32_1 = arith.constant 0 : i32
    return %c0_i32, %c0_i32_0 : i32, i32
  }
  func.func @transform_3(%arg0: i32) -> (i32, i32) {
    %c0_i32 = arith.constant 0 : i32
    %c0_i32_0 = arith.constant 0 : i32
    %c0_i32_1 = arith.constant 0 : i32
    return %c0_i32, %c0_i32_0 : i32, i32
  }
  func.func @transform_4(%arg0: i32) -> (i32, i32) {
    %c0_i32 = arith.constant 0 : i32
    %c0_i32_0 = arith.constant 0 : i32
    %c0_i32_1 = arith.constant 0 : i32
    return %c0_i32, %c0_i32_0 : i32, i32
  }
  func.func @transform_5(%arg0: i32) -> (i32, i32) {
    %c0_i32 = arith.constant 0 : i32
    %c0_i32_0 = arith.constant 0 : i32
    %c0_i32_1 = arith.constant 0 : i32
    return %c0_i32, %c0_i32_0 : i32, i32
  }
  func.func @transform_6(%arg0: i32) -> (i32, i32) {
    %c0_i32 = arith.constant 0 : i32
    %c0_i32_0 = arith.constant 0 : i32
    %c0_i32_1 = arith.constant 0 : i32
    return %c0_i32, %c0_i32_0 : i32, i32
  }
  func.func @transform_7(%arg0: i32) -> (i32, i32, i32) {
    %c0_i32 = arith.constant 0 : i32
    %c0_i32_0 = arith.constant 0 : i32
    %c0_i32_1 = arith.constant 0 : i32
    return %arg0, %c0_i32, %c0_i32_0 : i32, i32, i32
  }
}

</mosaic_0001>

<llo_original>
// kernel: tpu_custom_call.1
$region0: #{tpu_custom_call.1}
  #allocation0 [shape = 'u32[]', space=smem, size = 0x4, offset = 0x4, fixed_abs, tag = 'smem constant byte address 0x4 - core index']
  #allocation1 [shape = 'u32[144,128]{1,0:T(1,128)}', space=vmem, size = 0x12000, scoped, tag = 'internal scratch']
  %s0 = inlined_call_operand.vmem [shape: f32[2,16,128], index: 0, kind: input, shape index: {}]
  %s1 = inlined_call_operand.hbm [shape: f32[384,128], index: 1, kind: input, shape index: {}]
  %s2 = inlined_call_operand.vmem [shape: f32[32,16], index: 2, kind: input, shape index: {}]
  %s3 = inlined_call_operand.hbm [shape: f32[384,128], index: 3, kind: input, shape index: {}]
  %s4 = inlined_call_operand.hbm [shape: f32[128,128], index: 4, kind: input, shape index: {}]
  %s5 = inlined_call_operand.vmem [shape: f32[1,128], index: 5, kind: input, shape index: {}]
  %s6 = inlined_call_operand.vmem [shape: f32[1,128], index: 6, kind: input, shape index: {}]
  %s7 = inlined_call_operand.hbm [shape: f32[2,32,128], index: 7, kind: output, shape index: {}]
  %s8 = sld [smem:[#allocation0]]
  $region73: #{tpu_custom_call.1} parent=0
    _
  %s10 = ssub.s32 1, %s8
  %s11 = scalar_select 0, %s10, %s8
  $region1: #{tpu_custom_call.1} parent=0
    #allocation2 [shape = 'u8[196608]{0}', space=vmem, size = 0x30000, scoped, tag = 'input window, operand 1, single buffered']
    #allocation3 [shape = 's32[2]{0}', space=sflag, size = 0x8, scoped, tag = 'scoped memory for tpu_custom_call.1']
    #allocation4 [shape = 's32[2]{0}', space=sflag, size = 0x8, scoped, tag = 'scoped memory for tpu_custom_call.1']
    #allocation5 [shape = 'u8[196608]{0}', space=vmem, size = 0x30000, scoped, tag = 'input window, operand 3, single buffered']
    #allocation6 [shape = 's32[1]{0}', space=sflag, size = 0x4, scoped, tag = 'scoped memory for tpu_custom_call.1']
    #allocation7 [shape = 'u8[65536]{0}', space=vmem, size = 0x10000, scoped, tag = 'input window, operand 4, single buffered']
    #allocation8 [shape = 'u8[32768]{0}', space=vmem, size = 0x8000, scoped, tag = 'output window, operand 0']
    %12 = vsyncpa [#allocation3], 0
    %13 = vsyncpa [#allocation6], 0
    %14 = vsyncpa [#allocation4], 0
    %s15 = scalar_lea.sflag [#allocation4], 1
    %16 = vsyncpa %s15, 0
    loop: start=0, step=1, limit=4
    $region2: #{tpu_custom_call.1} parent=1 // loop_pre_header
      _
    $region3: #{tpu_custom_call.1} parent=1 // loop_header
      %s18 = sphi 0, %s22
      %p19 = scmp.ge.s32.totalorder %s18, 4
      %s28 = sphi 0, %s30
      %s31 = sphi 0, %s28
      %s32 = sphi 0, %s31
      %s48 = sphi 0, %s32
      %s52 = sphi 0, %s52
      %s54 = sphi 0, %s52
      %s55 = sphi 0, %s54
      %s69 = sphi 0, %s55
      %s73 = sphi 0, %s73
      %s75 = sphi 0, %s73
      %s76 = sphi 0, %s75
      %s90 = sphi 0, %s76
      %s94 = sphi 0, %s94
      %s96 = sphi 0, %s94
      %s97 = sphi 0, %s96
      %s111 = sphi 0, %s97
      %s115 = sphi 0, %s115
      %s117 = sphi 0, %s115
      %s118 = sphi 0, %s117
      %s132 = sphi 0, %s118
      %s136 = sphi 0, %s136
      %s138 = sphi 0, %s136
      %s139 = sphi 0, %s138
      %s153 = sphi 0, %s139
      %s157 = sphi 0, %s157
      %s159 = sphi 0, %s157
      %s160 = sphi 0, %s159
      %s174 = sphi 0, %s160
      %s180 = sphi 0, %s182
      %s183 = sphi 0, %s180
      %s184 = sphi 0, %s183
      %s200 = sphi 0, %s184
    $region4: #{tpu_custom_call.1} parent=1 // loop_header_branch
      %21 = sbr.rel (%p19) target = $region8
    $region5: #{tpu_custom_call.1} parent=1 // loop_body
      %s23 = ssub.s32 %s18, 1
      %s24 = ssub.s32 %s18, 2
      %s25 = sadd.s32 %s18, 1
      %s26 = ssub.s32 %s18, %s25
      %p27 = scmp.eq.s32.totalorder %s26, 0
      %s29 = sadd.s32 %s28, 1
      %s30 = scalar_select %p27, %s28, %s29
      %p33 = pneg %p27
      %p34 = scmp.eq.s32.totalorder %s18, 1
      %p35 = por %p33, %p34
      %p36 = scmp.ne.s32.totalorder %s28, %s31
      %p37 = scmp.eq.s32.totalorder %s18, 0
      %p38 = por %p36, %p37
      %p39 = scmp.ne.s32.totalorder %s28, %s31
      %p40 = scmp.eq.s32.totalorder %s23, 1
      %p41 = por %p39, %p40
      %p42 = scmp.ne.s32.totalorder %s31, %s32
      %p43 = scmp.eq.s32.totalorder %s23, 0
      %p44 = por %p42, %p43
      %p45 = scmp.ne.s32.totalorder %s31, %s32
      %p46 = scmp.eq.s32.totalorder %s24, 1
      %p47 = por %p45, %p46
      %p49 = scmp.ne.s32.totalorder %s32, %s48
      %p50 = scmp.eq.s32.totalorder %s24, 0
      %p51 = por %p49, %p50
      %s53 = sadd.s32 %s52, 1
      %p56 = scmp.eq.s32.totalorder %s18, 1
      %p57 = scmp.ne.s32.totalorder %s52, %s54
      %p58 = scmp.eq.s32.totalorder %s18, 0
      %p59 = por %p57, %p58
      %p60 = scmp.ne.s32.totalorder %s52, %s54
      %p61 = scmp.eq.s32.totalorder %s23, 1
      %p62 = por %p60, %p61
      %p63 = scmp.ne.s32.totalorder %s54, %s55
      %p64 = scmp.eq.s32.totalorder %s23, 0
      %p65 = por %p63, %p64
      %p66 = scmp.ne.s32.totalorder %s54, %s55
      %p67 = scmp.eq.s32.totalorder %s24, 1
      %p68 = por %p66, %p67
      %p70 = scmp.ne.s32.totalorder %s55, %s69
      %p71 = scmp.eq.s32.totalorder %s24, 0
      %p72 = por %p70, %p71
      %s74 = sadd.s32 %s73, 1
      %p77 = scmp.eq.s32.totalorder %s18, 1
      %p78 = scmp.ne.s32.totalorder %s73, %s75
      %p79 = scmp.eq.s32.totalorder %s18, 0
      %p80 = por %p78, %p79
      %p81 = scmp.ne.s32.totalorder %s73, %s75
      %p82 = scmp.eq.s32.totalorder %s23, 1
      %p83 = por %p81, %p82
      %p84 = scmp.ne.s32.totalorder %s75, %s76
      %p85 = scmp.eq.s32.totalorder %s23, 0
      %p86 = por %p84, %p85
      %p87 = scmp.ne.s32.totalorder %s75, %s76
      %p88 = scmp.eq.s32.totalorder %s24, 1
      %p89 = por %p87, %p88
      %p91 = scmp.ne.s32.totalorder %s76, %s90
      %p92 = scmp.eq.s32.totalorder %s24, 0
      %p93 = por %p91, %p92
      %s95 = sadd.s32 %s94, 1
      %p98 = scmp.eq.s32.totalorder %s18, 1
      %p99 = scmp.ne.s32.totalorder %s94, %s96
      %p100 = scmp.eq.s32.totalorder %s18, 0
      %p101 = por %p99, %p100
      %p102 = scmp.ne.s32.totalorder %s94, %s96
      %p103 = scmp.eq.s32.totalorder %s23, 1
      %p104 = por %p102, %p103
      %p105 = scmp.ne.s32.totalorder %s96, %s97
      %p106 = scmp.eq.s32.totalorder %s23, 0
      %p107 = por %p105, %p106
      %p108 = scmp.ne.s32.totalorder %s96, %s97
      %p109 = scmp.eq.s32.totalorder %s24, 1
      %p110 = por %p108, %p109
      %p112 = scmp.ne.s32.totalorder %s97, %s111
      %p113 = scmp.eq.s32.totalorder %s24, 0
      %p114 = por %p112, %p113
      %s116 = sadd.s32 %s115, 1
      %p119 = scmp.eq.s32.totalorder %s18, 1
      %p120 = scmp.ne.s32.totalorder %s115, %s117
      %p121 = scmp.eq.s32.totalorder %s18, 0
      %p122 = por %p120, %p121
      %p123 = scmp.ne.s32.totalorder %s115, %s117
      %p124 = scmp.eq.s32.totalorder %s23, 1
      %p125 = por %p123, %p124
      %p126 = scmp.ne.s32.totalorder %s117, %s118
      %p127 = scmp.eq.s32.totalorder %s23, 0
      %p128 = por %p126, %p127
      %p129 = scmp.ne.s32.totalorder %s117, %s118
      %p130 = scmp.eq.s32.totalorder %s24, 1
      %p131 = por %p129, %p130
      %p133 = scmp.ne.s32.totalorder %s118, %s132
      %p134 = scmp.eq.s32.totalorder %s24, 0
      %p135 = por %p133, %p134
      %s137 = sadd.s32 %s136, 1
      %p140 = scmp.eq.s32.totalorder %s18, 1
      %p141 = scmp.ne.s32.totalorder %s136, %s138
      %p142 = scmp.eq.s32.totalorder %s18, 0
      %p143 = por %p141, %p142
      %p144 = scmp.ne.s32.totalorder %s136, %s138
      %p145 = scmp.eq.s32.totalorder %s23, 1
      %p146 = por %p144, %p145
      %p147 = scmp.ne.s32.totalorder %s138, %s139
      %p148 = scmp.eq.s32.totalorder %s23, 0
      %p149 = por %p147, %p148
      %p150 = scmp.ne.s32.totalorder %s138, %s139
      %p151 = scmp.eq.s32.totalorder %s24, 1
      %p152 = por %p150, %p151
      %p154 = scmp.ne.s32.totalorder %s139, %s153
      %p155 = scmp.eq.s32.totalorder %s24, 0
      %p156 = por %p154, %p155
      %s158 = sadd.s32 %s157, 1
      %p161 = scmp.eq.s32.totalorder %s18, 1
      %p162 = scmp.ne.s32.totalorder %s157, %s159
      %p163 = scmp.eq.s32.totalorder %s18, 0
      %p164 = por %p162, %p163
      %p165 = scmp.ne.s32.totalorder %s157, %s159
      %p166 = scmp.eq.s32.totalorder %s23, 1
      %p167 = por %p165, %p166
      %p168 = scmp.ne.s32.totalorder %s159, %s160
      %p169 = scmp.eq.s32.totalorder %s23, 0
      %p170 = por %p168, %p169
      %p171 = scmp.ne.s32.totalorder %s159, %s160
      %p172 = scmp.eq.s32.totalorder %s24, 1
      %p173 = por %p171, %p172
      %p175 = scmp.ne.s32.totalorder %s160, %s174
      %p176 = scmp.eq.s32.totalorder %s24, 0
      %p177 = por %p175, %p176
      %s178 = ssub.s32 %s18, %s25
      %p179 = scmp.eq.s32.totalorder %s178, 0
      %s181 = sadd.s32 %s180, 1
      %s182 = scalar_select %p179, %s180, %s181
      %p185 = pneg %p179
      %p186 = scmp.eq.s32.totalorder %s18, 1
      %p187 = por %p185, %p186
      %p188 = scmp.ne.s32.totalorder %s180, %s183
      %p189 = scmp.eq.s32.totalorder %s18, 0
      %p190 = por %p188, %p189
      %p191 = scmp.ne.s32.totalorder %s180, %s183
      %p192 = scmp.eq.s32.totalorder %s23, 1
      %p193 = por %p191, %p192
      %p194 = scmp.ne.s32.totalorder %s183, %s184
      %p195 = scmp.eq.s32.totalorder %s23, 0
      %p196 = por %p194, %p195
      %p197 = scmp.ne.s32.totalorder %s183, %s184
      %p198 = scmp.eq.s32.totalorder %s24, 1
      %p199 = por %p197, %p198
      %p201 = scmp.ne.s32.totalorder %s184, %s200
      %p202 = scmp.eq.s32.totalorder %s24, 0
      %p203 = por %p201, %p202
      %p204 = scmp.le.s32.totalorder 1, %s18
      %p205 = scmp.lt.s32.totalorder %s18, 3
      %p206 = pnand %p204, %p205
      %p207 = pneg %p206
      // Predicated region
      $region9: #{tpu_custom_call.1} parent=5 // pred_check
        _
      $region10: #{tpu_custom_call.1} parent=5 // pred_check_branch
        %209 = sbr.rel (%p206) target = $region12
      $region11: #{tpu_custom_call.1} parent=5 // pred_region
        %s210 = ssub.s32 %s18, 1
        // Predicated region
        $region13: #{tpu_custom_call.1} parent=11 // pred_check
          %p211 = pneg %p65
        $region14: #{tpu_custom_call.1} parent=11 // pred_check_branch
          %213 = sbr.rel (%p211) target = $region16
        $region15: #{tpu_custom_call.1} parent=11 // pred_region
          %s215 = ssub.s32 6144, 6144
          %216 = vsyncadd [#allocation3], %s215
          %s217 = sshll.u32 [#allocation2], 4
          %s218 = int_to_ptr.vmem [resolvable:$true] %s217
          %223 = dma.hbm_to_vmem [thread:$0]  %s1, 6144, %s218, [#allocation3], 128, 128, 8
        $region16: #{tpu_custom_call.1} parent=11 // pred_fallthru
          _
        // Predicated region
        $region17: #{tpu_custom_call.1} parent=11 // pred_check
          %p224 = pneg %p86
        $region18: #{tpu_custom_call.1} parent=11 // pred_check_branch
          %226 = sbr.rel (%p224) target = $region20
        $region19: #{tpu_custom_call.1} parent=11 // pred_region
          _
        $region20: #{tpu_custom_call.1} parent=11 // pred_fallthru
          _
        // Predicated region
        $region21: #{tpu_custom_call.1} parent=11 // pred_check
          %p227 = pneg %p107
        $region22: #{tpu_custom_call.1} parent=11 // pred_check_branch
          %229 = sbr.rel (%p227) target = $region24
        $region23: #{tpu_custom_call.1} parent=11 // pred_region
          %s231 = ssub.s32 6144, 6144
          %232 = vsyncadd [#allocation6], %s231
          %s233 = sshll.u32 [#allocation5], 4
          %s234 = int_to_ptr.vmem [resolvable:$true] %s233
          %239 = dma.hbm_to_vmem [thread:$0]  %s3, 6144, %s234, [#allocation6], 128, 128, 8
        $region24: #{tpu_custom_call.1} parent=11 // pred_fallthru
          _
        // Predicated region
        $region25: #{tpu_custom_call.1} parent=11 // pred_check
          %p240 = pneg %p128
        $region26: #{tpu_custom_call.1} parent=11 // pred_check_branch
          %242 = sbr.rel (%p240) target = $region28
        $region27: #{tpu_custom_call.1} parent=11 // pred_region
          %s244 = ssub.s32 2048, 2048
          %245 = vsyncadd [#allocation6], %s244
          %s246 = sshll.u32 [#allocation7], 4
          %s247 = int_to_ptr.vmem [resolvable:$true] %s246
          %252 = dma.hbm_to_vmem [thread:$0]  %s4, 2048, %s247, [#allocation6], 128, 128, 8
        $region28: #{tpu_custom_call.1} parent=11 // pred_fallthru
          _
        // Predicated region
        $region29: #{tpu_custom_call.1} parent=11 // pred_check
          %p253 = pneg %p149
        $region30: #{tpu_custom_call.1} parent=11 // pred_check_branch
          %255 = sbr.rel (%p253) target = $region32
        $region31: #{tpu_custom_call.1} parent=11 // pred_region
          _
        $region32: #{tpu_custom_call.1} parent=11 // pred_fallthru
          _
        // Predicated region
        $region33: #{tpu_custom_call.1} parent=11 // pred_check
          %p256 = pneg %p170
        $region34: #{tpu_custom_call.1} parent=11 // pred_check_branch
          %258 = sbr.rel (%p256) target = $region36
        $region35: #{tpu_custom_call.1} parent=11 // pred_region
          _
        $region36: #{tpu_custom_call.1} parent=11 // pred_fallthru
          _
      $region12: #{tpu_custom_call.1} parent=5 // pred_fallthru
        _
      %p259 = scmp.lt.s32.totalorder %s18, 2
      // Predicated region
      $region37: #{tpu_custom_call.1} parent=5 // pred_check
        %p260 = pneg %p259
      $region38: #{tpu_custom_call.1} parent=5 // pred_check_branch
        %262 = sbr.rel (%p260) target = $region40
      $region39: #{tpu_custom_call.1} parent=5 // pred_region
        // Predicated region
        $region41: #{tpu_custom_call.1} parent=39 // pred_check
          %p263 = pneg %p38
        $region42: #{tpu_custom_call.1} parent=39 // pred_check_branch
          %265 = sbr.rel (%p263) target = $region44
        $region43: #{tpu_custom_call.1} parent=39 // pred_region
          %p266 = scmp.lt.s32.totalorder %s18, 1
          %s267 = scalar_select %p266, %s18, 1
          %s268 = smul.addr %s267, 2
          %s269 = smul.addr %s268, 8
          %s270 = scalar_lea.vmem %s0, %s269
        $region44: #{tpu_custom_call.1} parent=39 // pred_fallthru
          _
      $region40: #{tpu_custom_call.1} parent=5 // pred_fallthru
        _
      %p271 = scmp.le.s32.totalorder 1, %s18
      %p272 = scmp.lt.s32.totalorder %s18, 3
      %p273 = pnand %p271, %p272
      %p274 = pneg %p273
      // Predicated region
      $region45: #{tpu_custom_call.1} parent=5 // pred_check
        _
      $region46: #{tpu_custom_call.1} parent=5 // pred_check_branch
        %276 = sbr.rel (%p273) target = $region48
      $region47: #{tpu_custom_call.1} parent=5 // pred_region
        %s277 = ssub.s32 %s18, 1
        // Predicated region
        $region49: #{tpu_custom_call.1} parent=47 // pred_check
          %p278 = pneg %p65
        $region50: #{tpu_custom_call.1} parent=47 // pred_check_branch
          %280 = sbr.rel (%p278) target = $region52
        $region51: #{tpu_custom_call.1} parent=47 // pred_region
          %281 = dma.done [#allocation3], 6144
        $region52: #{tpu_custom_call.1} parent=47 // pred_fallthru
          _
        // Predicated region
        $region53: #{tpu_custom_call.1} parent=47 // pred_check
          %p282 = pneg %p107
        $region54: #{tpu_custom_call.1} parent=47 // pred_check_branch
          %284 = sbr.rel (%p282) target = $region56
        $region55: #{tpu_custom_call.1} parent=47 // pred_region
          %285 = dma.done [#allocation6], 6144
        $region56: #{tpu_custom_call.1} parent=47 // pred_fallthru
          _
        // Predicated region
        $region57: #{tpu_custom_call.1} parent=47 // pred_check
          %p286 = pneg %p128
        $region58: #{tpu_custom_call.1} parent=47 // pred_check_branch
          %288 = sbr.rel (%p286) target = $region60
        $region59: #{tpu_custom_call.1} parent=47 // pred_region
          %289 = dma.done [#allocation6], 2048
        $region60: #{tpu_custom_call.1} parent=47 // pred_fallthru
          _
        %p290 = scmp.lt.s32.totalorder %s23, 1
        %s291 = scalar_select %p290, %s23, 1
        %s292 = smul.addr %s291, 2
        %s293 = smul.addr %s292, 8
        %s294 = scalar_lea.vmem %s0, %s293
        %p295 = pneg %p44
        %p296 = pneg %p41
        %p297 = pneg %p65
        %p298 = pneg %p62
        %p299 = pneg %p86
        %p300 = pneg %p83
        %p301 = pneg %p107
        %p302 = pneg %p104
        %p303 = pneg %p128
        %p304 = pneg %p125
        %p305 = pneg %p149
        %p306 = pneg %p146
        %p307 = pneg %p170
        %p308 = pneg %p167
        %p309 = pneg %p196
        %p310 = pneg %p193
        %s311 = sand.u32 %s183, 1
        %s312 = scalar_lea.sflag [#allocation4], %s311
        %s313 = sand.u32 %s183, 1
        %s314 = smul.addr %s313, 32
        %s315 = scalar_lea.vmem [#allocation8], %s314
        %p316 = scmp.lt.s32.totalorder %s23, 1
        %s317 = scalar_select %p316, %s23, 1
        %s318 = smul.addr %s317, 2
        %s319 = smul.addr %s318, 8
        %s320 = scalar_lea.vmem %s0, %s319
        %v321 = vld [vmem:[%s320] sm:$0xff]
        %v322 = vld [vmem:[%s320 + $0x8] sm:$0xff]
        %vm325 = vcmask 1040384
        %v326 = vrot.slane %v321, 7
        %v327 = vrot.slane %v322, 7
        %v328 = vsel %vm325, %v326, %v327
        %v331 = vsel %vm325, 0.0, %v326
        %vm332 = vcmask 1046528
        %v333 = vrot.slane %v321, 1
        %v334 = vrot.slane %v322, 1
        %v335 = vsel %vm332, %v333, %v334
        %v338 = vsel %vm332, %v334, 0.0
        %v339 = vld [vmem:[#allocation2] sm:$0xff]
        %v340 = vld [vmem:[#allocation2 + $0x8] sm:$0xff]
        %v341 = vld [vmem:[#allocation2 + $0x10] sm:$0xff]
        %v342 = vld [vmem:[#allocation2 + $0x18] sm:$0xff]
        %v343 = vld [vmem:[#allocation2 + $0x20] sm:$0xff]
        %v344 = vld [vmem:[#allocation2 + $0x28] sm:$0xff]
        %v345 = vld [vmem:[#allocation2 + $0x30] sm:$0xff]
        %v346 = vld [vmem:[#allocation2 + $0x38] sm:$0xff]
        %v347 = vld [vmem:[#allocation2 + $0x40] sm:$0xff]
        %v348 = vld [vmem:[#allocation2 + $0x48] sm:$0xff]
        %v349 = vld [vmem:[#allocation2 + $0x50] sm:$0xff]
        %v350 = vld [vmem:[#allocation2 + $0x58] sm:$0xff]
        %v351 = vld [vmem:[#allocation2 + $0x60] sm:$0xff]
        %v352 = vld [vmem:[#allocation2 + $0x68] sm:$0xff]
        %v353 = vld [vmem:[#allocation2 + $0x70] sm:$0xff]
        %v354 = vld [vmem:[#allocation2 + $0x78] sm:$0xff]
        %v355 = vld [vmem:[#allocation2 + $0x80] sm:$0xff]
        %v356 = vld [vmem:[#allocation2 + $0x88] sm:$0xff]
        %v357 = vld [vmem:[#allocation2 + $0x90] sm:$0xff]
        %v358 = vld [vmem:[#allocation2 + $0x98] sm:$0xff]
        %v359 = vld [vmem:[#allocation2 + $0xa0] sm:$0xff]
        %v360 = vld [vmem:[#allocation2 + $0xa8] sm:$0xff]
        %v361 = vld [vmem:[#allocation2 + $0xb0] sm:$0xff]
        %v362 = vld [vmem:[#allocation2 + $0xb8] sm:$0xff]
        %v363 = vld [vmem:[#allocation2 + $0xc0] sm:$0xff]
        %v364 = vld [vmem:[#allocation2 + $0xc8] sm:$0xff]
        %v365 = vld [vmem:[#allocation2 + $0xd0] sm:$0xff]
        %v366 = vld [vmem:[#allocation2 + $0xd8] sm:$0xff]
        %v367 = vld [vmem:[#allocation2 + $0xe0] sm:$0xff]
        %v368 = vld [vmem:[#allocation2 + $0xe8] sm:$0xff]
        %v369 = vld [vmem:[#allocation2 + $0xf0] sm:$0xff]
        %v370 = vld [vmem:[#allocation2 + $0xf8] sm:$0xff]
        %v371 = vld [vmem:[#allocation2 + $0x100] sm:$0xff]
        %v372 = vld [vmem:[#allocation2 + $0x108] sm:$0xff]
        %v373 = vld [vmem:[#allocation2 + $0x110] sm:$0xff]
        %v374 = vld [vmem:[#allocation2 + $0x118] sm:$0xff]
        %v375 = vld [vmem:[#allocation2 + $0x120] sm:$0xff]
        %v376 = vld [vmem:[#allocation2 + $0x128] sm:$0xff]
        %v377 = vld [vmem:[#allocation2 + $0x130] sm:$0xff]
        %v378 = vld [vmem:[#allocation2 + $0x138] sm:$0xff]
        %v379 = vld [vmem:[#allocation2 + $0x140] sm:$0xff]
        %v380 = vld [vmem:[#allocation2 + $0x148] sm:$0xff]
        %v381 = vld [vmem:[#allocation2 + $0x150] sm:$0xff]
        %v382 = vld [vmem:[#allocation2 + $0x158] sm:$0xff]
        %v383 = vld [vmem:[#allocation2 + $0x160] sm:$0xff]
        %v384 = vld [vmem:[#allocation2 + $0x168] sm:$0xff]
        %v385 = vld [vmem:[#allocation2 + $0x170] sm:$0xff]
        %v386 = vld [vmem:[#allocation2 + $0x178] sm:$0xff]
        %v387 = vld [vmem:[%s5] sm:$0x1]
        %v389 = vlaneseq
        %v390 = vshrl.u32 %v389, 7
        %v391 = vsub.s32 0, %v390
        %v392 = vrot.slane %v387, %v391
        %394 = vmatprep.subr.mxu0 0.0
        %395 = vmatpush1.msra.mxu0 %v339
        %396 = vmatprep.subr.mxu0 0.0
        %397 = vmatpush1.msra.mxu0 %v340
        %398 = vmatprep.subr.mxu0 0.0
        %399 = vmatpush1.msra.mxu0 %v341
        %400 = vmatprep.subr.mxu0 0.0
        %401 = vmatpush1.msra.mxu0 %v342
        %402 = vmatprep.subr.mxu0 0.0
        %403 = vmatpush1.msra.mxu0 %v343
        %404 = vmatprep.subr.mxu0 0.0
        %405 = vmatpush1.msra.mxu0 %v344
        %406 = vmatprep.subr.mxu0 0.0
        %407 = vmatpush1.msra.mxu0 %v345
        %408 = vmatprep.subr.mxu0 0.0
        %409 = vmatpush1.msra.mxu0 %v346
        %410 = vmatprep.subr.mxu0 0.0
        %411 = vmatpush1.msra.mxu0 %v347
        %412 = vmatprep.subr.mxu0 0.0
        %413 = vmatpush1.msra.mxu0 %v348
        %414 = vmatprep.subr.mxu0 0.0
        %415 = vmatpush1.msra.mxu0 %v349
        %416 = vmatprep.subr.mxu0 0.0
        %417 = vmatpush1.msra.mxu0 %v350
        %418 = vmatprep.subr.mxu0 0.0
        %419 = vmatpush1.msra.mxu0 %v351
        %420 = vmatprep.subr.mxu0 0.0
        %421 = vmatpush1.msra.mxu0 %v352
        %422 = vmatprep.subr.mxu0 0.0
        %423 = vmatpush1.msra.mxu0 %v353
        %424 = vmatprep.subr.mxu0 0.0
        %425 = vmatpush1.msra.mxu0 %v354
        %426 = vmatprep.subr.mxu0 0.0
        %427 = vmatpush1.msra.mxu0 %v355
        %428 = vmatprep.subr.mxu0 0.0
        %429 = vmatpush1.msra.mxu0 %v356
        %430 = vmatprep.subr.mxu0 0.0
        %431 = vmatpush1.msra.mxu0 %v357
        %432 = vmatprep.subr.mxu0 0.0
        %433 = vmatpush1.msra.mxu0 %v358
        %434 = vmatprep.subr.mxu0 0.0
        %435 = vmatpush1.msra.mxu0 %v359
        %436 = vmatprep.subr.mxu0 0.0
        %437 = vmatpush1.msra.mxu0 %v360
        %438 = vmatprep.subr.mxu0 0.0
        %439 = vmatpush1.msra.mxu0 %v361
        %440 = vmatprep.subr.mxu0 0.0
        %441 = vmatpush1.msra.mxu0 %v362
        %442 = vmatprep.subr.mxu0 0.0
        %443 = vmatpush1.msra.mxu0 %v363
        %444 = vmatprep.subr.mxu0 0.0
        %445 = vmatpush1.msra.mxu0 %v364
        %446 = vmatprep.subr.mxu0 0.0
        %447 = vmatpush1.msra.mxu0 %v365
        %448 = vmatprep.subr.mxu0 0.0
        %449 = vmatpush1.msra.mxu0 %v366
        %450 = vmatprep.subr.mxu0 0.0
        %451 = vmatpush1.msra.mxu0 %v367
        %452 = vmatprep.subr.mxu0 0.0
        %453 = vmatpush1.msra.mxu0 %v368
        %454 = vmatprep.subr.mxu0 0.0
        %455 = vmatpush1.msra.mxu0 %v369
        %456 = vmatprep.subr.mxu0 0.0
        %457 = vmatpush1.msra.mxu0 %v370
        %458 = vmatprep.mubr.f32.mxu0 %v321
        %459 = vmatmul.mubr.f32.gmra.mrb[0].mxu0 %v331
        %v460 = vpop.f32.mrb[0].mxu0
        %v461 = vadd.f32 %v392, %v460
        %v462 = vpop.f32.mrb[0].mxu0
        %463 = vmatprep.mubr.f32.mxu0 %v322
        %464 = vmatmul.mubr.f32.gmra.mrb[0].mxu0 %v328
        %v465 = vpop.f32.mrb[0].mxu0
        %v466 = vadd.f32 %v392, %v465
        %v467 = vpop.f32.mrb[0].mxu0
        %468 = vdwg.mxu0
        %469 = vmatprep.subr.mxu0 0.0
        %470 = vmatpush1.msra.mxu0 %v371
        %471 = vmatprep.subr.mxu0 0.0
        %472 = vmatpush1.msra.mxu0 %v372
        %473 = vmatprep.subr.mxu0 0.0
        %474 = vmatpush1.msra.mxu0 %v373
        %475 = vmatprep.subr.mxu0 0.0
        %476 = vmatpush1.msra.mxu0 %v374
        %477 = vmatprep.subr.mxu0 0.0
        %478 = vmatpush1.msra.mxu0 %v375
        %479 = vmatprep.subr.mxu0 0.0
        %480 = vmatpush1.msra.mxu0 %v376
        %481 = vmatprep.subr.mxu0 0.0
        %482 = vmatpush1.msra.mxu0 %v377
        %483 = vmatprep.subr.mxu0 0.0
        %484 = vmatpush1.msra.mxu0 %v378
        %485 = vmatprep.subr.mxu0 0.0
        %486 = vmatpush1.msra.mxu0 %v379
        %487 = vmatprep.subr.mxu0 0.0
        %488 = vmatpush1.msra.mxu0 %v380
        %489 = vmatprep.subr.mxu0 0.0
        %490 = vmatpush1.msra.mxu0 %v381
        %491 = vmatprep.subr.mxu0 0.0
        %492 = vmatpush1.msra.mxu0 %v382
        %493 = vmatprep.subr.mxu0 0.0
        %494 = vmatpush1.msra.mxu0 %v383
        %495 = vmatprep.subr.mxu0 0.0
        %496 = vmatpush1.msra.mxu0 %v384
        %497 = vmatprep.subr.mxu0 0.0
        %498 = vmatpush1.msra.mxu0 %v385
        %499 = vmatprep.subr.mxu0 0.0
        %500 = vmatpush1.msra.mxu0 %v386
        %501 = vmatprep.subr.mxu0 0.0
        %502 = vmatpush1.msra.mxu0 0.0
        %503 = vmatprep.subr.mxu0 0.0
        %504 = vmatpush1.msra.mxu0 0.0
        %505 = vmatprep.subr.mxu0 0.0
        %506 = vmatpush1.msra.mxu0 0.0
        %507 = vmatprep.subr.mxu0 0.0
        %508 = vmatpush1.msra.mxu0 0.0
        %509 = vmatprep.subr.mxu0 0.0
        %510 = vmatpush1.msra.mxu0 0.0
        %511 = vmatprep.subr.mxu0 0.0
        %512 = vmatpush1.msra.mxu0 0.0
        %513 = vmatprep.subr.mxu0 0.0
        %514 = vmatpush1.msra.mxu0 0.0
        %515 = vmatprep.subr.mxu0 0.0
        %516 = vmatpush1.msra.mxu0 0.0
        %517 = vmatprep.subr.mxu0 0.0
        %518 = vmatpush1.msra.mxu0 0.0
        %519 = vmatprep.subr.mxu0 0.0
        %520 = vmatpush1.msra.mxu0 0.0
        %521 = vmatprep.subr.mxu0 0.0
        %522 = vmatpush1.msra.mxu0 0.0
        %523 = vmatprep.subr.mxu0 0.0
        %524 = vmatpush1.msra.mxu0 0.0
        %525 = vmatprep.subr.mxu0 0.0
        %526 = vmatpush1.msra.mxu0 0.0
        %527 = vmatprep.subr.mxu0 0.0
        %528 = vmatpush1.msra.mxu0 0.0
        %529 = vmatprep.subr.mxu0 0.0
        %530 = vmatpush1.msra.mxu0 0.0
        %531 = vmatprep.subr.mxu0 0.0
        %532 = vmatpush1.msra.mxu0 0.0
        %533 = vmatprep.mubr.f32.mxu0 0.0
        %534 = vmatmul.mubr.f32.gmra.mrb[0].mxu0 %v335
        %v535 = vpop.f32.mrb[0].mxu0
        %v536 = vadd.f32 %v461, %v535
        %v537 = vpop.f32.mrb[0].mxu0
        %538 = vmatprep.mubr.f32.mxu0 0.0
        %539 = vmatmul.mubr.f32.gmra.mrb[0].mxu0 %v338
        %v540 = vpop.f32.mrb[0].mxu0
        %v541 = vadd.f32 %v466, %v540
        %v542 = vpop.f32.mrb[0].mxu0
        %543 = vdwg.mxu0
        %vm544 = vcmp.ge.f32.partialorder %v536, 0.0
        %vm545 = vcmp.ge.f32.partialorder %v541, 0.0
        %v546 = vmul.f32 %v536, 0.2
        %v547 = vmul.f32 %v541, 0.2
        %v548 = vsel %vm544, %v536, %v546
        %v549 = vsel %vm545, %v541, %v547
        %v550 = vld [vmem:[#allocation7] sm:$0xff]
        %v551 = vld [vmem:[#allocation7 + $0x8] sm:$0xff]
        %v552 = vld [vmem:[#allocation7 + $0x10] sm:$0xff]
        %v553 = vld [vmem:[#allocation7 + $0x18] sm:$0xff]
        %v554 = vld [vmem:[#allocation7 + $0x20] sm:$0xff]
        %v555 = vld [vmem:[#allocation7 + $0x28] sm:$0xff]
        %v556 = vld [vmem:[#allocation7 + $0x30] sm:$0xff]
        %v557 = vld [vmem:[#allocation7 + $0x38] sm:$0xff]
        %v558 = vld [vmem:[#allocation7 + $0x40] sm:$0xff]
        %v559 = vld [vmem:[#allocation7 + $0x48] sm:$0xff]
        %v560 = vld [vmem:[#allocation7 + $0x50] sm:$0xff]
        %v561 = vld [vmem:[#allocation7 + $0x58] sm:$0xff]
        %v562 = vld [vmem:[#allocation7 + $0x60] sm:$0xff]
        %v563 = vld [vmem:[#allocation7 + $0x68] sm:$0xff]
        %v564 = vld [vmem:[#allocation7 + $0x70] sm:$0xff]
        %v565 = vld [vmem:[#allocation7 + $0x78] sm:$0xff]
        %566 = vmatprep.subr.mxu0 0.0
        %567 = vmatpush1.msra.mxu0 %v550
        %568 = vmatprep.subr.mxu0 0.0
        %569 = vmatpush1.msra.mxu0 %v551
        %570 = vmatprep.subr.mxu0 0.0
        %571 = vmatpush1.msra.mxu0 %v552
        %572 = vmatprep.subr.mxu0 0.0
        %573 = vmatpush1.msra.mxu0 %v553
        %574 = vmatprep.subr.mxu0 0.0
        %575 = vmatpush1.msra.mxu0 %v554
        %576 = vmatprep.subr.mxu0 0.0
        %577 = vmatpush1.msra.mxu0 %v555
        %578 = vmatprep.subr.mxu0 0.0
        %579 = vmatpush1.msra.mxu0 %v556
        %580 = vmatprep.subr.mxu0 0.0
        %581 = vmatpush1.msra.mxu0 %v557
        %582 = vmatprep.subr.mxu0 0.0
        %583 = vmatpush1.msra.mxu0 %v558
        %584 = vmatprep.subr.mxu0 0.0
        %585 = vmatpush1.msra.mxu0 %v559
        %586 = vmatprep.subr.mxu0 0.0
        %587 = vmatpush1.msra.mxu0 %v560
        %588 = vmatprep.subr.mxu0 0.0
        %589 = vmatpush1.msra.mxu0 %v561
        %590 = vmatprep.subr.mxu0 0.0
        %591 = vmatpush1.msra.mxu0 %v562
        %592 = vmatprep.subr.mxu0 0.0
        %593 = vmatpush1.msra.mxu0 %v563
        %594 = vmatprep.subr.mxu0 0.0
        %595 = vmatpush1.msra.mxu0 %v564
        %596 = vmatprep.subr.mxu0 0.0
        %597 = vmatpush1.msra.mxu0 %v565
        %598 = vmatprep.subr.mxu0 0.0
        %599 = vmatpush1.msra.mxu0 0.0
        %600 = vmatprep.subr.mxu0 0.0
        %601 = vmatpush1.msra.mxu0 0.0
        %602 = vmatprep.subr.mxu0 0.0
        %603 = vmatpush1.msra.mxu0 0.0
        %604 = vmatprep.subr.mxu0 0.0
        %605 = vmatpush1.msra.mxu0 0.0
        %606 = vmatprep.subr.mxu0 0.0
        %607 = vmatpush1.msra.mxu0 0.0
        %608 = vmatprep.subr.mxu0 0.0
        %609 = vmatpush1.msra.mxu0 0.0
        %610 = vmatprep.subr.mxu0 0.0
        %611 = vmatpush1.msra.mxu0 0.0
        %612 = vmatprep.subr.mxu0 0.0
        %613 = vmatpush1.msra.mxu0 0.0
        %614 = vmatprep.subr.mxu0 0.0
        %615 = vmatpush1.msra.mxu0 0.0
        %616 = vmatprep.subr.mxu0 0.0
        %617 = vmatpush1.msra.mxu0 0.0
        %618 = vmatprep.subr.mxu0 0.0
        %619 = vmatpush1.msra.mxu0 0.0
        %620 = vmatprep.subr.mxu0 0.0
        %621 = vmatpush1.msra.mxu0 0.0
        %622 = vmatprep.subr.mxu0 0.0
        %623 = vmatpush1.msra.mxu0 0.0
        %624 = vmatprep.subr.mxu0 0.0
        %625 = vmatpush1.msra.mxu0 0.0
        %626 = vmatprep.subr.mxu0 0.0
        %627 = vmatpush1.msra.mxu0 0.0
        %628 = vmatprep.subr.mxu0 0.0
        %629 = vmatpush1.msra.mxu0 0.0
        %630 = vmatprep.mubr.f32.mxu0 0.0
        %631 = vmatmul.mubr.f32.gmra.mrb[0].mxu0 %v321
        %v632 = vpop.f32.mrb[0].mxu0
        %v633 = vadd.f32 0.0, %v632
        %v634 = vpop.f32.mrb[0].mxu0
        %635 = vmatprep.mubr.f32.mxu0 0.0
        %636 = vmatmul.mubr.f32.gmra.mrb[0].mxu0 %v322
        %v637 = vpop.f32.mrb[0].mxu0
        %v638 = vadd.f32 0.0, %v637
        %v639 = vpop.f32.mrb[0].mxu0
        %640 = vdwg.mxu0
        %v641 = vld [vmem:[%s2] sm:$0xff]
        %v642 = vld [vmem:[%s2 + $0x8] sm:$0xff]
        %v643 = vld [vmem:[%s2 + $0x10] sm:$0xff]
        %v644 = vld [vmem:[%s2 + $0x18] sm:$0xff]
        %vm645 = vcmask 130048
        %v647 = vsel %vm645, %v641, 0
        %v650 = vsel %vm645, %v642, 0
        %v653 = vsel %vm645, %v643, 0
        %v656 = vsel %vm645, %v644, 0
        %658 = vmatprep.subr.mxu0 %v633
        %659 = vmatpush1.msra.mxu0 %v548
        %660 = vmatprep.subr.mxu0 %v638
        %661 = vmatpush1.msra.mxu0 %v549
        %662 = vmatprep.subr.mxu0 0.0
        %663 = vmatpush1.msra.mxu0 0.0
        %664 = vmatprep.subr.mxu0 0.0
        %665 = vmatpush1.msra.mxu0 0.0
        %666 = vmatprep.subr.mxu0 0.0
        %667 = vmatpush1.msra.mxu0 0.0
        %668 = vmatprep.subr.mxu0 0.0
        %669 = vmatpush1.msra.mxu0 0.0
        %670 = vmatprep.subr.mxu0 0.0
        %671 = vmatpush1.msra.mxu0 0.0
        %672 = vmatprep.subr.mxu0 0.0
        %673 = vmatpush1.msra.mxu0 0.0
        %674 = vmatprep.subr.mxu0 0.0
        %675 = vmatpush1.msra.mxu0 0.0
        %676 = vmatprep.subr.mxu0 0.0
        %677 = vmatpush1.msra.mxu0 0.0
        %678 = vmatprep.subr.mxu0 0.0
        %679 = vmatpush1.msra.mxu0 0.0
        %680 = vmatprep.subr.mxu0 0.0
        %681 = vmatpush1.msra.mxu0 0.0
        %682 = vmatprep.subr.mxu0 0.0
        %683 = vmatpush1.msra.mxu0 0.0
        %684 = vmatprep.subr.mxu0 0.0
        %685 = vmatpush1.msra.mxu0 0.0
        %686 = vmatprep.subr.mxu0 0.0
        %687 = vmatpush1.msra.mxu0 0.0
        %688 = vmatprep.subr.mxu0 0.0
        %689 = vmatpush1.msra.mxu0 0.0
        %690 = vmatprep.subr.mxu0 0.0
        %691 = vmatpush1.msra.mxu0 0.0
        %692 = vmatprep.subr.mxu0 0.0
        %693 = vmatpush1.msra.mxu0 0.0
        %694 = vmatprep.subr.mxu0 0.0
        %695 = vmatpush1.msra.mxu0 0.0
        %696 = vmatprep.subr.mxu0 0.0
        %697 = vmatpush1.msra.mxu0 0.0
        %698 = vmatprep.subr.mxu0 0.0
        %699 = vmatpush1.msra.mxu0 0.0
        %700 = vmatprep.subr.mxu0 0.0
        %701 = vmatpush1.msra.mxu0 0.0
        %702 = vmatprep.subr.mxu0 0.0
        %703 = vmatpush1.msra.mxu0 0.0
        %704 = vmatprep.subr.mxu0 0.0
        %705 = vmatpush1.msra.mxu0 0.0
        %706 = vmatprep.subr.mxu0 0.0
        %707 = vmatpush1.msra.mxu0 0.0
        %708 = vmatprep.subr.mxu0 0.0
        %709 = vmatpush1.msra.mxu0 0.0
        %710 = vmatprep.subr.mxu0 0.0
        %711 = vmatpush1.msra.mxu0 0.0
        %712 = vmatprep.subr.mxu0 0.0
        %713 = vmatpush1.msra.mxu0 0.0
        %714 = vmatprep.subr.mxu0 0.0
        %715 = vmatpush1.msra.mxu0 0.0
        %716 = vmatprep.subr.mxu0 0.0
        %717 = vmatpush1.msra.mxu0 0.0
        %718 = vmatprep.subr.mxu0 0.0
        %719 = vmatpush1.msra.mxu0 0.0
        %720 = vmatprep.subr.mxu0 0.0
        %721 = vmatpush1.msra.mxu0 0.0
        %722 = vmatprep.mubr.f32.mxu0 0.0
        %723 = vmatmul.mubr.f32.gmra.mrb[0].mxu0 %v647
        %v724 = vpop.f32.mrb[0].mxu0
        %v725 = vadd.f32 0.0, %v724
        %v726 = vpop.f32.mrb[0].mxu0
        %v727 = vadd.f32 0.0, %v726
        %728 = vmatprep.mubr.f32.mxu0 0.0
        %729 = vmatmul.mubr.f32.gmra.mrb[0].mxu0 %v650
        %v730 = vpop.f32.mrb[0].mxu0
        %v731 = vadd.f32 0.0, %v730
        %v732 = vpop.f32.mrb[0].mxu0
        %v733 = vadd.f32 0.0, %v732
        %734 = vmatprep.mubr.f32.mxu0 0.0
        %735 = vmatmul.mubr.f32.gmra.mrb[0].mxu0 %v653
        %v736 = vpop.f32.mrb[0].mxu0
        %v737 = vadd.f32 0.0, %v736
        %v738 = vpop.f32.mrb[0].mxu0
        %v739 = vadd.f32 0.0, %v738
        %740 = vmatprep.mubr.f32.mxu0 0.0
        %741 = vmatmul.mubr.f32.gmra.mrb[0].mxu0 %v656
        %v742 = vpop.f32.mrb[0].mxu0
        %v743 = vadd.f32 0.0, %v742
        %v744 = vpop.f32.mrb[0].mxu0
        %v745 = vadd.f32 0.0, %v744
        %746 = vdwg.mxu0
        %v751 = vrot.slane %v725, 7
        %v752 = vrot.slane %v731, 7
        %v753 = vsel %vm325, %v751, %v752
        %v754 = vrot.slane %v737, 7
        %v755 = vsel %vm325, %v752, %v754
        %v756 = vrot.slane %v743, 7
        %v757 = vsel %vm325, %v754, %v756
        %v762 = vsel %vm325, 0.0, %v751
        %v763 = vrot.slane %v725, 1
        %v764 = vrot.slane %v731, 1
        %v765 = vsel %vm332, %v763, %v764
        %v766 = vrot.slane %v737, 1
        %v767 = vsel %vm332, %v764, %v766
        %v768 = vrot.slane %v743, 1
        %v769 = vsel %vm332, %v766, %v768
        %v774 = vsel %vm332, %v768, 0.0
        %v775 = vld [vmem:[#allocation5] sm:$0xff]
        %v776 = vld [vmem:[#allocation5 + $0x8] sm:$0xff]
        %v777 = vld [vmem:[#allocation5 + $0x10] sm:$0xff]
        %v778 = vld [vmem:[#allocation5 + $0x18] sm:$0xff]
        %v779 = vld [vmem:[#allocation5 + $0x20] sm:$0xff]
        %v780 = vld [vmem:[#allocation5 + $0x28] sm:$0xff]
        %v781 = vld [vmem:[#allocation5 + $0x30] sm:$0xff]
        %v782 = vld [vmem:[#allocation5 + $0x38] sm:$0xff]
        %v783 = vld [vmem:[#allocation5 + $0x40] sm:$0xff]
        %v784 = vld [vmem:[#allocation5 + $0x48] sm:$0xff]
        %v785 = vld [vmem:[#allocation5 + $0x50] sm:$0xff]
        %v786 = vld [vmem:[#allocation5 + $0x58] sm:$0xff]
        %v787 = vld [vmem:[#allocation5 + $0x60] sm:$0xff]
        %v788 = vld [vmem:[#allocation5 + $0x68] sm:$0xff]
        %v789 = vld [vmem:[#allocation5 + $0x70] sm:$0xff]
        %v790 = vld [vmem:[#allocation5 + $0x78] sm:$0xff]
        %v791 = vld [vmem:[#allocation5 + $0x80] sm:$0xff]
        %v792 = vld [vmem:[#allocation5 + $0x88] sm:$0xff]
        %v793 = vld [vmem:[#allocation5 + $0x90] sm:$0xff]
        %v794 = vld [vmem:[#allocation5 + $0x98] sm:$0xff]
        %v795 = vld [vmem:[#allocation5 + $0xa0] sm:$0xff]
        %v796 = vld [vmem:[#allocation5 + $0xa8] sm:$0xff]
        %v797 = vld [vmem:[#allocation5 + $0xb0] sm:$0xff]
        %v798 = vld [vmem:[#allocation5 + $0xb8] sm:$0xff]
        %v799 = vld [vmem:[#allocation5 + $0xc0] sm:$0xff]
        %v800 = vld [vmem:[#allocation5 + $0xc8] sm:$0xff]
        %v801 = vld [vmem:[#allocation5 + $0xd0] sm:$0xff]
        %v802 = vld [vmem:[#allocation5 + $0xd8] sm:$0xff]
        %v803 = vld [vmem:[#allocation5 + $0xe0] sm:$0xff]
        %v804 = vld [vmem:[#allocation5 + $0xe8] sm:$0xff]
        %v805 = vld [vmem:[#allocation5 + $0xf0] sm:$0xff]
        %v806 = vld [vmem:[#allocation5 + $0xf8] sm:$0xff]
        %v807 = vld [vmem:[#allocation5 + $0x100] sm:$0xff]
        %v808 = vld [vmem:[#allocation5 + $0x108] sm:$0xff]
        %v809 = vld [vmem:[#allocation5 + $0x110] sm:$0xff]
        %v810 = vld [vmem:[#allocation5 + $0x118] sm:$0xff]
        %v811 = vld [vmem:[#allocation5 + $0x120] sm:$0xff]
        %v812 = vld [vmem:[#allocation5 + $0x128] sm:$0xff]
        %v813 = vld [vmem:[#allocation5 + $0x130] sm:$0xff]
        %v814 = vld [vmem:[#allocation5 + $0x138] sm:$0xff]
        %v815 = vld [vmem:[#allocation5 + $0x140] sm:$0xff]
        %v816 = vld [vmem:[#allocation5 + $0x148] sm:$0xff]
        %v817 = vld [vmem:[#allocation5 + $0x150] sm:$0xff]
        %v818 = vld [vmem:[#allocation5 + $0x158] sm:$0xff]
        %v819 = vld [vmem:[#allocation5 + $0x160] sm:$0xff]
        %v820 = vld [vmem:[#allocation5 + $0x168] sm:$0xff]
        %v821 = vld [vmem:[#allocation5 + $0x170] sm:$0xff]
        %v822 = vld [vmem:[#allocation5 + $0x178] sm:$0xff]
        %v823 = vld [vmem:[%s6] sm:$0x1]
        %v825 = vlaneseq
        %v826 = vshrl.u32 %v825, 7
        %v827 = vsub.s32 0, %v826
        %v828 = vrot.slane %v823, %v827
        %830 = vmatprep.subr.mxu0 0.0
        %831 = vmatpush1.msra.mxu0 %v775
        %832 = vmatprep.subr.mxu0 0.0
        %833 = vmatpush1.msra.mxu0 %v776
        %834 = vmatprep.subr.mxu0 0.0
        %835 = vmatpush1.msra.mxu0 %v777
        %836 = vmatprep.subr.mxu0 0.0
        %837 = vmatpush1.msra.mxu0 %v778
        %838 = vmatprep.subr.mxu0 0.0
        %839 = vmatpush1.msra.mxu0 %v779
        %840 = vmatprep.subr.mxu0 0.0
        %841 = vmatpush1.msra.mxu0 %v780
        %842 = vmatprep.subr.mxu0 0.0
        %843 = vmatpush1.msra.mxu0 %v781
        %844 = vmatprep.subr.mxu0 0.0
        %845 = vmatpush1.msra.mxu0 %v782
        %846 = vmatprep.subr.mxu0 0.0
        %847 = vmatpush1.msra.mxu0 %v783
        %848 = vmatprep.subr.mxu0 0.0
        %849 = vmatpush1.msra.mxu0 %v784
        %850 = vmatprep.subr.mxu0 0.0
        %851 = vmatpush1.msra.mxu0 %v785
        %852 = vmatprep.subr.mxu0 0.0
        %853 = vmatpush1.msra.mxu0 %v786
        %854 = vmatprep.subr.mxu0 0.0
        %855 = vmatpush1.msra.mxu0 %v787
        %856 = vmatprep.subr.mxu0 0.0
        %857 = vmatpush1.msra.mxu0 %v788
        %858 = vmatprep.subr.mxu0 0.0
        %859 = vmatpush1.msra.mxu0 %v789
        %860 = vmatprep.subr.mxu0 0.0
        %861 = vmatpush1.msra.mxu0 %v790
        %862 = vmatprep.subr.mxu0 0.0
        %863 = vmatpush1.msra.mxu0 %v791
        %864 = vmatprep.subr.mxu0 0.0
        %865 = vmatpush1.msra.mxu0 %v792
        %866 = vmatprep.subr.mxu0 0.0
        %867 = vmatpush1.msra.mxu0 %v793
        %868 = vmatprep.subr.mxu0 0.0
        %869 = vmatpush1.msra.mxu0 %v794
        %870 = vmatprep.subr.mxu0 0.0
        %871 = vmatpush1.msra.mxu0 %v795
        %872 = vmatprep.subr.mxu0 0.0
        %873 = vmatpush1.msra.mxu0 %v796
        %874 = vmatprep.subr.mxu0 0.0
        %875 = vmatpush1.msra.mxu0 %v797
        %876 = vmatprep.subr.mxu0 0.0
        %877 = vmatpush1.msra.mxu0 %v798
        %878 = vmatprep.subr.mxu0 0.0
        %879 = vmatpush1.msra.mxu0 %v799
        %880 = vmatprep.subr.mxu0 0.0
        %881 = vmatpush1.msra.mxu0 %v800
        %882 = vmatprep.subr.mxu0 0.0
        %883 = vmatpush1.msra.mxu0 %v801
        %884 = vmatprep.subr.mxu0 0.0
        %885 = vmatpush1.msra.mxu0 %v802
        %886 = vmatprep.subr.mxu0 0.0
        %887 = vmatpush1.msra.mxu0 %v803
        %888 = vmatprep.subr.mxu0 0.0
        %889 = vmatpush1.msra.mxu0 %v804
        %890 = vmatprep.subr.mxu0 0.0
        %891 = vmatpush1.msra.mxu0 %v805
        %892 = vmatprep.subr.mxu0 0.0
        %893 = vmatpush1.msra.mxu0 %v806
        %894 = vmatprep.mubr.f32.mxu0 %v725
        %895 = vmatmul.mubr.f32.gmra.mrb[0].mxu0 %v762
        %v896 = vpop.f32.mrb[0].mxu0
        %v897 = vadd.f32 %v828, %v896
        %v898 = vpop.f32.mrb[0].mxu0
        %899 = vmatprep.mubr.f32.mxu0 %v731
        %900 = vmatmul.mubr.f32.gmra.mrb[0].mxu0 %v753
        %v901 = vpop.f32.mrb[0].mxu0
        %v902 = vadd.f32 %v828, %v901
        %v903 = vpop.f32.mrb[0].mxu0
        %904 = vmatprep.mubr.f32.mxu0 %v737
        %905 = vmatmul.mubr.f32.gmra.mrb[0].mxu0 %v755
        %v906 = vpop.f32.mrb[0].mxu0
        %v907 = vadd.f32 %v828, %v906
        %v908 = vpop.f32.mrb[0].mxu0
        %909 = vmatprep.mubr.f32.mxu0 %v743
        %910 = vmatmul.mubr.f32.gmra.mrb[0].mxu0 %v757
        %v911 = vpop.f32.mrb[0].mxu0
        %v912 = vadd.f32 %v828, %v911
        %v913 = vpop.f32.mrb[0].mxu0
        %914 = vdwg.mxu0
        %915 = vmatprep.subr.mxu0 0.0
        %916 = vmatpush1.msra.mxu0 %v807
        %917 = vmatprep.subr.mxu0 0.0
        %918 = vmatpush1.msra.mxu0 %v808
        %919 = vmatprep.subr.mxu0 0.0
        %920 = vmatpush1.msra.mxu0 %v809
        %921 = vmatprep.subr.mxu0 0.0
        %922 = vmatpush1.msra.mxu0 %v810
        %923 = vmatprep.subr.mxu0 0.0
        %924 = vmatpush1.msra.mxu0 %v811
        %925 = vmatprep.subr.mxu0 0.0
        %926 = vmatpush1.msra.mxu0 %v812
        %927 = vmatprep.subr.mxu0 0.0
        %928 = vmatpush1.msra.mxu0 %v813
        %929 = vmatprep.subr.mxu0 0.0
        %930 = vmatpush1.msra.mxu0 %v814
        %931 = vmatprep.subr.mxu0 0.0
        %932 = vmatpush1.msra.mxu0 %v815
        %933 = vmatprep.subr.mxu0 0.0
        %934 = vmatpush1.msra.mxu0 %v816
        %935 = vmatprep.subr.mxu0 0.0
        %936 = vmatpush1.msra.mxu0 %v817
        %937 = vmatprep.subr.mxu0 0.0
        %938 = vmatpush1.msra.mxu0 %v818
        %939 = vmatprep.subr.mxu0 0.0
        %940 = vmatpush1.msra.mxu0 %v819
        %941 = vmatprep.subr.mxu0 0.0
        %942 = vmatpush1.msra.mxu0 %v820
        %943 = vmatprep.subr.mxu0 0.0
        %944 = vmatpush1.msra.mxu0 %v821
        %945 = vmatprep.subr.mxu0 0.0
        %946 = vmatpush1.msra.mxu0 %v822
        %947 = vmatprep.subr.mxu0 0.0
        %948 = vmatpush1.msra.mxu0 0.0
        %949 = vmatprep.subr.mxu0 0.0
        %950 = vmatpush1.msra.mxu0 0.0
        %951 = vmatprep.subr.mxu0 0.0
        %952 = vmatpush1.msra.mxu0 0.0
        %953 = vmatprep.subr.mxu0 0.0
        %954 = vmatpush1.msra.mxu0 0.0
        %955 = vmatprep.subr.mxu0 0.0
        %956 = vmatpush1.msra.mxu0 0.0
        %957 = vmatprep.subr.mxu0 0.0
        %958 = vmatpush1.msra.mxu0 0.0
        %959 = vmatprep.subr.mxu0 0.0
        %960 = vmatpush1.msra.mxu0 0.0
        %961 = vmatprep.subr.mxu0 0.0
        %962 = vmatpush1.msra.mxu0 0.0
        %963 = vmatprep.subr.mxu0 0.0
        %964 = vmatpush1.msra.mxu0 0.0
        %965 = vmatprep.subr.mxu0 0.0
        %966 = vmatpush1.msra.mxu0 0.0
        %967 = vmatprep.subr.mxu0 0.0
        %968 = vmatpush1.msra.mxu0 0.0
        %969 = vmatprep.subr.mxu0 0.0
        %970 = vmatpush1.msra.mxu0 0.0
        %971 = vmatprep.subr.mxu0 0.0
        %972 = vmatpush1.msra.mxu0 0.0
        %973 = vmatprep.subr.mxu0 0.0
        %974 = vmatpush1.msra.mxu0 0.0
        %975 = vmatprep.subr.mxu0 0.0
        %976 = vmatpush1.msra.mxu0 0.0
        %977 = vmatprep.subr.mxu0 0.0
        %978 = vmatpush1.msra.mxu0 0.0
        %979 = vmatprep.mubr.f32.mxu0 0.0
        %980 = vmatmul.mubr.f32.gmra.mrb[0].mxu0 %v765
        %v981 = vpop.f32.mrb[0].mxu0
        %v982 = vadd.f32 %v897, %v981
        %v983 = vpop.f32.mrb[0].mxu0
        %984 = vmatprep.mubr.f32.mxu0 0.0
        %985 = vmatmul.mubr.f32.gmra.mrb[0].mxu0 %v767
        %v986 = vpop.f32.mrb[0].mxu0
        %v987 = vadd.f32 %v902, %v986
        %v988 = vpop.f32.mrb[0].mxu0
        %989 = vmatprep.mubr.f32.mxu0 0.0
        %990 = vmatmul.mubr.f32.gmra.mrb[0].mxu0 %v769
        %v991 = vpop.f32.mrb[0].mxu0
        %v992 = vadd.f32 %v907, %v991
        %v993 = vpop.f32.mrb[0].mxu0
        %994 = vmatprep.mubr.f32.mxu0 0.0
        %995 = vmatmul.mubr.f32.gmra.mrb[0].mxu0 %v774
        %v996 = vpop.f32.mrb[0].mxu0
        %v997 = vadd.f32 %v912, %v996
        %v998 = vpop.f32.mrb[0].mxu0
        %999 = vdwg.mxu0
        %vm1000 = vcmp.ge.f32.partialorder %v982, 0.0
        %vm1001 = vcmp.ge.f32.partialorder %v987, 0.0
        %vm1002 = vcmp.ge.f32.partialorder %v992, 0.0
        %vm1003 = vcmp.ge.f32.partialorder %v997, 0.0
        %v1004 = vmul.f32 %v982, 0.2
        %v1005 = vmul.f32 %v987, 0.2
        %v1006 = vmul.f32 %v992, 0.2
        %v1007 = vmul.f32 %v997, 0.2
        %v1008 = vsel %vm1000, %v982, %v1004
        %v1009 = vsel %vm1001, %v987, %v1005
        %v1010 = vsel %vm1002, %v992, %v1006
        %v1011 = vsel %vm1003, %v997, %v1007
        %v1012 = vadd.f32 %v1008, %v727
        %v1013 = vadd.f32 %v1009, %v733
        %v1014 = vadd.f32 %v1010, %v739
        %v1015 = vadd.f32 %v1011, %v745
        %1016 = vst [vmem:[%s315] sm:$0xff] %v1012
        %1017 = vst [vmem:[%s315 + $0x8] sm:$0xff] %v1013
        %1018 = vst [vmem:[%s315 + $0x10] sm:$0xff] %v1014
        %1019 = vst [vmem:[%s315 + $0x18] sm:$0xff] %v1015
        %s1020 = sand.u32 %s183, 1
        %s1021 = scalar_lea.sflag [#allocation4], %s1020
        %s1022 = sand.u32 %s183, 1
        %s1023 = smul.addr %s1022, 32
        %s1024 = scalar_lea.vmem [#allocation8], %s1023
        // Predicated region
        $region61: #{tpu_custom_call.1} parent=47 // pred_check
          %p1025 = pneg %p193
        $region62: #{tpu_custom_call.1} parent=47 // pred_check_branch
          %1027 = sbr.rel (%p1025) target = $region64
        $region63: #{tpu_custom_call.1} parent=47 // pred_region
          %s1029 = ssub.s32 512, 512
          %1030 = vsyncadd %s1021, %s1029
          %s1031 = smul.addr %s23, 4
          %s1032 = smul.addr %s1031, 128
          %s1033 = scalar_lea.hbm %s7, %s1032
          %s1034 = sshll.u32 %s1024, 4
          %s1035 = int_to_ptr.vmem [resolvable:$true] %s1034
          %1040 = dma.vmem_to_hbm [thread:$0]  %s1035, 512, %s1033, %s1021, 128, 128, 8
        $region64: #{tpu_custom_call.1} parent=47 // pred_fallthru
          _
      $region48: #{tpu_custom_call.1} parent=5 // pred_fallthru
        _
      %p1041 = scmp.le.s32.totalorder 2, %s18
      // Predicated region
      $region65: #{tpu_custom_call.1} parent=5 // pred_check
        %p1042 = pneg %p1041
      $region66: #{tpu_custom_call.1} parent=5 // pred_check_branch
        %1044 = sbr.rel (%p1042) target = $region68
      $region67: #{tpu_custom_call.1} parent=5 // pred_region
        %s1045 = ssub.s32 %s18, 2
        // Predicated region
        $region69: #{tpu_custom_call.1} parent=67 // pred_check
          %p1046 = pneg %p199
        $region70: #{tpu_custom_call.1} parent=67 // pred_check_branch
          %1048 = sbr.rel (%p1046) target = $region72
        $region71: #{tpu_custom_call.1} parent=67 // pred_region
          %s1049 = sand.u32 %s184, 1
          %s1050 = scalar_lea.sflag [#allocation4], %s1049
          %s1051 = sand.u32 %s184, 1
          %s1052 = smul.addr %s1051, 32
          %s1053 = scalar_lea.vmem [#allocation8], %s1052
          %1054 = dma.done %s1050, 512
        $region72: #{tpu_custom_call.1} parent=67 // pred_fallthru
          _
      $region68: #{tpu_custom_call.1} parent=5 // pred_fallthru
        _
    $region6: #{tpu_custom_call.1} parent=1 // loop_footer
      %s22 = sadd.s32 1, %s18
    $region7: #{tpu_custom_call.1} parent=1 // loop_footer_branch
      %17 = sbr.rel target = $region3
    $region8: #{tpu_custom_call.1} parent=1 // loop_exit
      _
    %1055 = vsyncpa [#allocation3], 1
    %s1056 = scalar_lea.sflag [#allocation3], 1
    %1057 = vsyncpa %s1056, 1
    %1058 = vsyncpa [#allocation6], 1
    %1059 = vsyncpa [#allocation4], 1
    %s1060 = scalar_lea.sflag [#allocation4], 1
    %1061 = vsyncpa %s1060, 1

</llo_original>
